<compile_context>
chip_gen: v7x
topology: tpu7x:2x2x1
jax: 0.10.0
libtpu: 0.0.40
codegen_flags: <defaults>
</compile_context>

<pallas_src>
import functools

import jax
import jax.numpy as jnp
from jax.experimental import pallas as pl
from jax.experimental.pallas import tpu as pltpu

ACTION_DIM = 3
HIDDEN_LAYER = 70          # logical hidden size (matches the PyTorch module)
HIDDEN_PAD = 128           # lane-dense padded hidden size used inside the kernel
STATE_DIM = 8              # TODO(synk): TradingEnv unavailable; representative small state dim
MAX_TILE_B = 2048          # batch rows per grid step (VMEM-safe on v5e/v6e/v7x)
MIN_SPLIT_B = 64           # above this, force >=2 grid steps so both v7x TCs get work


def _cdiv(a, b):
    return -(-a // b)


def _round_up(n, m):
    return _cdiv(n, m) * m


def _make_kernel(apply_softmax):
    def kernel(x_ref, w1_ref, b1_ref, w2_ref, b2_ref, w3_ref, b3_ref, o_ref):
        # bf16 MXU operands, f32 accumulation; all elementwise math stays f32.
        x = x_ref[...].astype(jnp.bfloat16)                                    # (TB, S)
        h = jnp.dot(x, w1_ref[...], preferred_element_type=jnp.float32) + b1_ref[...]
        h = jnp.maximum(h, 0.0)                                                # ReLU (f32)
        h = jnp.dot(h.astype(jnp.bfloat16), w2_ref[...],
                    preferred_element_type=jnp.float32) + b2_ref[...]
        h = jnp.maximum(h, 0.0)                                                # ReLU (f32)
        out = jnp.dot(h.astype(jnp.bfloat16), w3_ref[...],
                      preferred_element_type=jnp.float32) + b3_ref[...]
        if apply_softmax:
            m = jnp.max(out, axis=-1, keepdims=True)
            e = jnp.exp(out - m)                                               # EUP
            s = jnp.sum(e, axis=-1, keepdims=True)
            # Exact divide (hidden under the MXU): rows sum to 1 at f32 precision,
            # safe for sampling / log-prob gradients downstream.
            out = e / s
        o_ref[...] = out.astype(o_ref.dtype)                                   # (TB, A)
    return kernel


def prepare_params(torch_layout_params):
    """One-time conversion of PyTorch-layout params (W: (out, in), b: (out,)):
    W is transposed to (in, out), zero-padded so the hidden dim is HIDDEN_PAD
    (lane-dense 128) and cast to bf16 (MXU operand dtype); biases stay f32 as
    (1, N) rows.  Call once at init / after each optimizer step, NOT per forward."""
    w1, b1, w2, b2, w3, b3 = torch_layout_params
    hp = HIDDEN_PAD - HIDDEN_LAYER
    w1_t = jnp.pad(w1.T, ((0, 0), (0, hp))).astype(jnp.bfloat16)   # (S, Hp)   bf16
    b1_p = jnp.pad(b1.reshape(1, -1), ((0, 0), (0, hp)))           # (1, Hp)   f32
    w2_t = jnp.pad(w2.T, ((0, hp), (0, hp))).astype(jnp.bfloat16)  # (Hp, Hp)  bf16
    b2_p = jnp.pad(b2.reshape(1, -1), ((0, 0), (0, hp)))           # (1, Hp)   f32
    w3_t = jnp.pad(w3.T, ((0, hp), (0, 0))).astype(jnp.bfloat16)   # (Hp, A)   bf16
    b3_p = b3.reshape(1, -1)                                       # (1, A)    f32
    return (w1_t, b1_p, w2_t, b2_p, w3_t, b3_p)


@functools.partial(jax.jit, static_argnames=("logits",))
def policy_forward(x, kernel_params, logits=True):
    """Pallas forward pass. x: (B, STATE_DIM) f32, kernel_params from
    prepare_params(). Returns (B, ACTION_DIM) logits (or probs if logits=False).

    Note: at B <= ~8 (per-env-step inference) the call is launch/DMA-latency
    bound and no in-kernel tuning helps — batch env steps (vmap across envs)
    to reach the B >= few-hundred regime where the MXU work dominates."""
    w1_t, b1_p, w2_t, b2_p, w3_t, b3_p = kernel_params
    B = x.shape[0]

    # Tight batch tiling: as few tiles as possible (amortize ~0.35us/step grid
    # overhead) but >=2 tiles for moderate B so the "parallel" batch axis can
    # use both v7x TensorCores (no-op on single-TC v5e/v6e).
    n_tiles = max(_cdiv(B, MAX_TILE_B), 2 if B > MIN_SPLIT_B else 1)
    tile_b = _round_up(_cdiv(B, n_tiles), 8)
    b_pad = n_tiles * tile_b
    if b_pad != B:
        # < 8*n_tiles zero rows; zeros are benign through ReLU/softmax and are
        # sliced off below.
        x = jnp.pad(x, ((0, b_pad - B), (0, 0)))

    # Weights/biases: constant block index -> stay VMEM-resident across steps
    # (no per-step re-DMA); x / out tiles are pipelined over the batch grid.
    resident = lambda a: pl.BlockSpec(a.shape, lambda i: (0, 0))

    # Cost estimate reflects the padded bf16 work actually executed.
    mxu_flops = 2 * b_pad * (STATE_DIM * HIDDEN_PAD
                             + HIDDEN_PAD * HIDDEN_PAD
                             + HIDDEN_PAD * ACTION_DIM)
    weight_bytes = (2 * (STATE_DIM * HIDDEN_PAD + HIDDEN_PAD * HIDDEN_PAD
                         + HIDDEN_PAD * ACTION_DIM)            # bf16 weights
                    + 4 * (2 * HIDDEN_PAD + ACTION_DIM))       # f32 biases
    cost = pl.CostEstimate(
        flops=mxu_flops,
        transcendentals=0 if logits else b_pad * ACTION_DIM,
        bytes_accessed=4 * b_pad * (STATE_DIM + ACTION_DIM) + weight_bytes,
    )

    out = pl.pallas_call(
        _make_kernel(apply_softmax=not logits),
        out_shape=jax.ShapeDtypeStruct((b_pad, ACTION_DIM), jnp.float32),
        grid=(n_tiles,),
        in_specs=[
            pl.BlockSpec((tile_b, STATE_DIM), lambda i: (i, 0)),   # x tiles (pipelined)
            resident(w1_t), resident(b1_p),
            resident(w2_t), resident(b2_p),
            resident(w3_t), resident(b3_p),
        ],
        out_specs=pl.BlockSpec((tile_b, ACTION_DIM), lambda i: (i, 0)),
        compiler_params=pltpu.CompilerParams(
            dimension_semantics=("parallel",),
            vmem_limit_bytes=32 * 1024 * 1024,   # lift v5e's 16 MiB scoped default
        ),
        cost_estimate=cost,
    )(x, w1_t, b1_p, w2_t, b2_p, w3_t, b3_p)

    return out[:B] if b_pad != B else out


def init_torch_layout_params(key):
    """Deterministic init mimicking nn.Linear's default U(-1/sqrt(fan_in), ...)
    in PyTorch layout (W: (out, in), b: (out,))."""
    def linear_init(k, fan_in, fan_out):
        kw, kb = jax.random.split(k)
        bound = 1.0 / jnp.sqrt(float(fan_in))
        w = jax.random.uniform(kw, (fan_out, fan_in), jnp.float32, -bound, bound)
        b = jax.random.uniform(kb, (fan_out,), jnp.float32, -bound, bound)
        return w, b

    k1, k2, k3 = jax.random.split(key, 3)
    w1, b1 = linear_init(k1, STATE_DIM, HIDDEN_LAYER)
    w2, b2 = linear_init(k2, HIDDEN_LAYER, HIDDEN_LAYER)
    w3, b3 = linear_init(k3, HIDDEN_LAYER, ACTION_DIM)
    return (w1, b1, w2, b2, w3, b3)


def _reference_forward(x, torch_params, logits=True, mxu_bf16=False):
    """Pure-JAX reference. mxu_bf16=True mimics the kernel's bf16-operand /
    f32-accumulate matmuls for a tight check of the Pallas arithmetic."""
    w1, b1, w2, b2, w3, b3 = torch_params

    def mm(a, w):
        if mxu_bf16:
            return jnp.dot(a.astype(jnp.bfloat16), w.T.astype(jnp.bfloat16),
                           preferred_element_type=jnp.float32)
        return a @ w.T

    h = jnp.maximum(mm(x, w1) + b1, 0.0)
    h = jnp.maximum(mm(h, w2) + b2, 0.0)
    out = mm(h, w3) + b3
    if not logits:
        out = jax.nn.softmax(out, axis=1)
    return out


if __name__ == "__main__":
    key = jax.random.PRNGKey(0)
    kp, kx1, kx2 = jax.random.split(key, 3)

    torch_params = init_torch_layout_params(kp)
    kernel_params = prepare_params(torch_params)   # one-time layout conversion

    # --- small batch (per-env-step use case; latency bound, grid=(1,)) ---
    batch = 2
    x = jax.random.normal(kx1, (batch, STATE_DIM), jnp.float32)

    out = jax.block_until_ready(policy_forward(x, kernel_params, logits=True))
    assert out.shape == (batch, ACTION_DIM)
    # Tight check vs a reference using the same bf16-operand / f32-acc matmuls.
    ref_bf16 = _reference_forward(x, torch_params, logits=True, mxu_bf16=True)
    assert jnp.allclose(out, ref_bf16, atol=5e-3), (out, ref_bf16)
    # Loose check vs the f32 PyTorch-equivalent reference (bf16 MXU operands
    # mean the forward is no longer bit-exact; ~1e-2 abs worst case).
    ref_f32 = _reference_forward(x, torch_params, logits=True)
    assert jnp.allclose(out, ref_f32, atol=5e-2), (out, ref_f32)

    # softmax path (fused epilogue, exact divide -> rows sum to 1 in f32)
    probs = jax.block_until_ready(policy_forward(x, kernel_params, logits=False))
    assert jnp.allclose(jnp.sum(probs, axis=1), 1.0, atol=1e-5)
    probs_ref = _reference_forward(x, torch_params, logits=False)
    assert jnp.allclose(probs, probs_ref, atol=2e-2), (probs, probs_ref)

    # --- larger batch: tight tiling (2 tiles x 304 rows, only 8 padded rows) ---
    batch2 = 600
    x2 = jax.random.normal(kx2, (batch2, STATE_DIM), jnp.float32)
    out2 = jax.block_until_ready(policy_forward(x2, kernel_params, logits=True))
    assert out2.shape == (batch2, ACTION_DIM)
    ref2_bf16 = _reference_forward(x2, torch_params, logits=True, mxu_bf16=True)
    assert jnp.allclose(out2, ref2_bf16, atol=5e-3)
    ref2_f32 = _reference_forward(x2, torch_params, logits=True)
    assert jnp.allclose(out2, ref2_f32, atol=5e-2)

    print("KERNEL_OK")
</pallas_src>

<mosaic_0001>
module attributes {stable_mosaic.version = 11 : i64} {
  func.func @kernel(%arg0: i32, %arg1: memref<8x8xf32, #tpu.memory_space<vmem>>, %arg2: memref<8x128xbf16, #tpu.memory_space<vmem>>, %arg3: memref<1x128xf32, #tpu.memory_space<vmem>>, %arg4: memref<128x128xbf16, #tpu.memory_space<vmem>>, %arg5: memref<1x128xf32, #tpu.memory_space<vmem>>, %arg6: memref<128x3xbf16, #tpu.memory_space<vmem>>, %arg7: memref<1x3xf32, #tpu.memory_space<vmem>>, %arg8: memref<8x3xf32, #tpu.memory_space<vmem>>) attributes {dimension_semantics = [#tpu.dimension_semantics<parallel>], iteration_bounds = array<i64: 1>, scalar_prefetch = 0 : i64, scratch_operands = 0 : i64, tpu.core_type = #tpu.core_type<tc>, window_params = [{transform_indices = @transform_0, window_bounds = array<i64: 8, 8>}, {pipeline_mode = #tpu.pipeline_mode<synchronous>, transform_indices = @transform_1, window_bounds = array<i64: 8, 128>}, {pipeline_mode = #tpu.pipeline_mode<synchronous>, transform_indices = @transform_2, window_bounds = array<i64: 1, 128>}, {pipeline_mode = #tpu.pipeline_mode<synchronous>, transform_indices = @transform_3, window_bounds = array<i64: 128, 128>}, {pipeline_mode = #tpu.pipeline_mode<synchronous>, transform_indices = @transform_4, window_bounds = array<i64: 1, 128>}, {pipeline_mode = #tpu.pipeline_mode<synchronous>, transform_indices = @transform_5, window_bounds = array<i64: 128, 3>}, {pipeline_mode = #tpu.pipeline_mode<synchronous>, transform_indices = @transform_6, window_bounds = array<i64: 1, 3>}, {transform_indices = @transform_7, window_bounds = array<i64: 8, 3>}]} {
    %c0 = arith.constant 0 : index
    %c0_0 = arith.constant 0 : index
    %0 = vector.load %arg1[%c0, %c0_0] : memref<8x8xf32, #tpu.memory_space<vmem>>, vector<8x8xf32>
    %1 = arith.truncf %0 : vector<8x8xf32> to vector<8x8xbf16>
    %c0_1 = arith.constant 0 : index
    %c0_2 = arith.constant 0 : index
    %2 = vector.load %arg2[%c0_1, %c0_2] : memref<8x128xbf16, #tpu.memory_space<vmem>>, vector<8x128xbf16>
    %cst = arith.constant dense<0.000000e+00> : vector<8x128xf32>
    %3 = tpu.matmul %1, %2, %cst {dimension_numbers = #tpu.dot_dimension_numbers<[1], [0], [0], [1], [0, 0, 1, 1], [], []>} : vector<8x8xbf16>, vector<8x128xbf16>, vector<8x128xf32> -> vector<8x128xf32>
    %c0_3 = arith.constant 0 : index
    %c0_4 = arith.constant 0 : index
    %4 = vector.load %arg3[%c0_3, %c0_4] : memref<1x128xf32, #tpu.memory_space<vmem>>, vector<1x128xf32>
    %5 = vector.broadcast %4 : vector<1x128xf32> to vector<8x128xf32>
    %6 = arith.addf %3, %5 : vector<8x128xf32>
    %cst_5 = arith.constant 0.000000e+00 : f32
    %7 = vector.broadcast %cst_5 : f32 to vector<8x128xf32>
    %8 = arith.maximumf %6, %7 : vector<8x128xf32>
    %9 = arith.truncf %8 : vector<8x128xf32> to vector<8x128xbf16>
    %c0_6 = arith.constant 0 : index
    %c0_7 = arith.constant 0 : index
    %10 = vector.load %arg4[%c0_6, %c0_7] : memref<128x128xbf16, #tpu.memory_space<vmem>>, vector<128x128xbf16>
    %cst_8 = arith.constant dense<0.000000e+00> : vector<8x128xf32>
    %11 = tpu.matmul %9, %10, %cst_8 {dimension_numbers = #tpu.dot_dimension_numbers<[1], [0], [0], [1], [0, 0, 1, 1], [], []>} : vector<8x128xbf16>, vector<128x128xbf16>, vector<8x128xf32> -> vector<8x128xf32>
    %c0_9 = arith.constant 0 : index
    %c0_10 = arith.constant 0 : index
    %12 = vector.load %arg5[%c0_9, %c0_10] : memref<1x128xf32, #tpu.memory_space<vmem>>, vector<1x128xf32>
    %13 = vector.broadcast %12 : vector<1x128xf32> to vector<8x128xf32>
    %14 = arith.addf %11, %13 : vector<8x128xf32>
    %cst_11 = arith.constant 0.000000e+00 : f32
    %15 = vector.broadcast %cst_11 : f32 to vector<8x128xf32>
    %16 = arith.maximumf %14, %15 : vector<8x128xf32>
    %17 = arith.truncf %16 : vector<8x128xf32> to vector<8x128xbf16>
    %c0_12 = arith.constant 0 : index
    %c0_13 = arith.constant 0 : index
    %18 = vector.load %arg6[%c0_12, %c0_13] : memref<128x3xbf16, #tpu.memory_space<vmem>>, vector<128x3xbf16>
    %cst_14 = arith.constant dense<0.000000e+00> : vector<8x3xf32>
    %19 = tpu.matmul %17, %18, %cst_14 {dimension_numbers = #tpu.dot_dimension_numbers<[1], [0], [0], [1], [0, 0, 1, 1], [], []>} : vector<8x128xbf16>, vector<128x3xbf16>, vector<8x3xf32> -> vector<8x3xf32>
    %c0_15 = arith.constant 0 : index
    %c0_16 = arith.constant 0 : index
    %20 = vector.load %arg7[%c0_15, %c0_16] : memref<1x3xf32, #tpu.memory_space<vmem>>, vector<1x3xf32>
    %21 = vector.broadcast %20 : vector<1x3xf32> to vector<8x3xf32>
    %22 = arith.addf %19, %21 : vector<8x3xf32>
    %c0_17 = arith.constant 0 : index
    %c0_18 = arith.constant 0 : index
    %23 = vector.load %arg8[%c0_17, %c0_18] : memref<8x3xf32, #tpu.memory_space<vmem>>, vector<8x3xf32>
    tpu.vector_store %arg8[%c0_17, %c0_18], %22 {strides = array<i32>} : memref<8x3xf32, #tpu.memory_space<vmem>>, vector<8x3xf32>,
    return
  }
  func.func @transform_0(%arg0: i32) -> (i32, i32) {
    %c0_i32 = arith.constant 0 : i32
    %c0_i32_0 = arith.constant 0 : i32
    return %arg0, %c0_i32 : i32, i32
  }
  func.func @transform_1(%arg0: i32) -> (i32, i32) {
    %c0_i32 = arith.constant 0 : i32
    %c0_i32_0 = arith.constant 0 : i32
    %c0_i32_1 = arith.constant 0 : i32
    return %c0_i32, %c0_i32_0 : i32, i32
  }
  func.func @transform_2(%arg0: i32) -> (i32, i32) {
    %c0_i32 = arith.constant 0 : i32
    %c0_i32_0 = arith.constant 0 : i32
    %c0_i32_1 = arith.constant 0 : i32
    return %c0_i32, %c0_i32_0 : i32, i32
  }
  func.func @transform_3(%arg0: i32) -> (i32, i32) {
    %c0_i32 = arith.constant 0 : i32
    %c0_i32_0 = arith.constant 0 : i32
    %c0_i32_1 = arith.constant 0 : i32
    return %c0_i32, %c0_i32_0 : i32, i32
  }
  func.func @transform_4(%arg0: i32) -> (i32, i32) {
    %c0_i32 = arith.constant 0 : i32
    %c0_i32_0 = arith.constant 0 : i32
    %c0_i32_1 = arith.constant 0 : i32
    return %c0_i32, %c0_i32_0 : i32, i32
  }
  func.func @transform_5(%arg0: i32) -> (i32, i32) {
    %c0_i32 = arith.constant 0 : i32
    %c0_i32_0 = arith.constant 0 : i32
    %c0_i32_1 = arith.constant 0 : i32
    return %c0_i32, %c0_i32_0 : i32, i32
  }
  func.func @transform_6(%arg0: i32) -> (i32, i32) {
    %c0_i32 = arith.constant 0 : i32
    %c0_i32_0 = arith.constant 0 : i32
    %c0_i32_1 = arith.constant 0 : i32
    return %c0_i32, %c0_i32_0 : i32, i32
  }
  func.func @transform_7(%arg0: i32) -> (i32, i32) {
    %c0_i32 = arith.constant 0 : i32
    %c0_i32_0 = arith.constant 0 : i32
    return %arg0, %c0_i32 : i32, i32
  }
}

</mosaic_0001>

<llo_original>
// kernel: policy_forward.1
$region0: #{policy_forward.1}
  #allocation0 [shape = 'u32[]', space=smem, size = 0x4, offset = 0x4, fixed_abs, tag = 'smem constant byte address 0x4 - core index']
  #allocation1 [shape = 'u32[144,128]{1,0:T(1,128)}', space=vmem, size = 0x12000, scoped, tag = 'internal scratch']
  %s0 = inlined_call_operand.vmem [shape: f32[8,8], index: 0, kind: input, shape index: {}]
  %s1 = inlined_call_operand.vmem [shape: bf16[8,128], index: 1, kind: input, shape index: {}]
  %s2 = inlined_call_operand.vmem [shape: f32[1,128], index: 2, kind: input, shape index: {}]
  %s3 = inlined_call_operand.vmem [shape: bf16[128,128], index: 3, kind: input, shape index: {}]
  %s4 = inlined_call_operand.vmem [shape: f32[1,128], index: 4, kind: input, shape index: {}]
  %s5 = inlined_call_operand.vmem [shape: bf16[128,3], index: 5, kind: input, shape index: {}]
  %s6 = inlined_call_operand.vmem [shape: f32[1,3], index: 6, kind: input, shape index: {}]
  %s7 = inlined_call_operand.vmem [shape: f32[8,3], index: 7, kind: output, shape index: {}]
  %s8 = sld [smem:[#allocation0]]
  $region38: #{policy_forward.1} parent=0
    _
  %s10 = ssub.s32 1, %s8
  %s11 = scalar_select 0, %s10, %s8
  // Predicated region
  $region2: #{policy_forward.1} parent=0 // pred_check
    _
  $region3: #{policy_forward.1} parent=0 // pred_check_branch
    %13 = sbr.rel (0) target = $region5
  $region4: #{policy_forward.1} parent=0 // pred_region
    _
  $region5: #{policy_forward.1} parent=0 // pred_fallthru
    _
  // Predicated region
  $region6: #{policy_forward.1} parent=0 // pred_check
    _
  $region7: #{policy_forward.1} parent=0 // pred_check_branch
    %15 = sbr.rel (0) target = $region9
  $region8: #{policy_forward.1} parent=0 // pred_region
    _
  $region9: #{policy_forward.1} parent=0 // pred_fallthru
    _
  // Predicated region
  $region10: #{policy_forward.1} parent=0 // pred_check
    _
  $region11: #{policy_forward.1} parent=0 // pred_check_branch
    %17 = sbr.rel (0) target = $region13
  $region12: #{policy_forward.1} parent=0 // pred_region
    _
  $region13: #{policy_forward.1} parent=0 // pred_fallthru
    _
  // Predicated region
  $region14: #{policy_forward.1} parent=0 // pred_check
    _
  $region15: #{policy_forward.1} parent=0 // pred_check_branch
    %19 = sbr.rel (0) target = $region17
  $region16: #{policy_forward.1} parent=0 // pred_region
    _
  $region17: #{policy_forward.1} parent=0 // pred_fallthru
    _
  // Predicated region
  $region18: #{policy_forward.1} parent=0 // pred_check
    _
  $region19: #{policy_forward.1} parent=0 // pred_check_branch
    %21 = sbr.rel (0) target = $region21
  $region20: #{policy_forward.1} parent=0 // pred_region
    _
  $region21: #{policy_forward.1} parent=0 // pred_fallthru
    _
  // Predicated region
  $region22: #{policy_forward.1} parent=0 // pred_check
    _
  $region23: #{policy_forward.1} parent=0 // pred_check_branch
    %23 = sbr.rel (0) target = $region25
  $region24: #{policy_forward.1} parent=0 // pred_region
    _
  $region25: #{policy_forward.1} parent=0 // pred_fallthru
    _
  // Predicated region
  $region26: #{policy_forward.1} parent=0 // pred_check
    _
  $region27: #{policy_forward.1} parent=0 // pred_check_branch
    %25 = sbr.rel (0) target = $region29
  $region28: #{policy_forward.1} parent=0 // pred_region
    _
  $region29: #{policy_forward.1} parent=0 // pred_fallthru
    _
  %v27 = vld [vmem:[%s0] sm:$0xff]
  %v28 = vpack.c.bf16 %v27, %v27
  %v29 = vld [vmem:[%s1] sm:$0xf]
  %v30 = vld [vmem:[%s2] sm:$0x1]
  %v32 = vlaneseq
  %v33 = vshrl.u32 %v32, 7
  %v34 = vsub.s32 0, %v33
  %v35 = vrot.slane %v30, %v34
  %vm37 = vcmask 64512
  %v39 = vsel %vm37, %v28, 0
  %vm41 = vcmask 1043456
  %v43 = vsel %vm41, %v29, 0
  %45 = vmatprep.subr.bf16.mxu0 0
  %46 = vmatpush1.bf16.msra.mxu0 %v43
  %47 = vmatprep.subr.bf16.mxu0 0
  %48 = vmatpush1.bf16.msra.mxu0 0
  %49 = vmatprep.subr.bf16.mxu0 0
  %50 = vmatpush1.bf16.msra.mxu0 0
  %51 = vmatprep.subr.bf16.mxu0 0
  %52 = vmatpush1.bf16.msra.mxu0 0
  %53 = vmatprep.subr.bf16.mxu0 0
  %54 = vmatpush1.bf16.msra.mxu0 0
  %55 = vmatprep.subr.bf16.mxu0 0
  %56 = vmatpush1.bf16.msra.mxu0 0
  %57 = vmatprep.subr.bf16.mxu0 0
  %58 = vmatpush1.bf16.msra.mxu0 0
  %59 = vmatprep.subr.bf16.mxu0 0
  %60 = vmatpush1.bf16.msra.mxu0 0
  %61 = vmatprep.subr.bf16.mxu0 0
  %62 = vmatpush1.bf16.msra.mxu0 0
  %63 = vmatprep.subr.bf16.mxu0 0
  %64 = vmatpush1.bf16.msra.mxu0 0
  %65 = vmatprep.subr.bf16.mxu0 0
  %66 = vmatpush1.bf16.msra.mxu0 0
  %67 = vmatprep.subr.bf16.mxu0 0
  %68 = vmatpush1.bf16.msra.mxu0 0
  %69 = vmatprep.subr.bf16.mxu0 0
  %70 = vmatpush1.bf16.msra.mxu0 0
  %71 = vmatprep.subr.bf16.mxu0 0
  %72 = vmatpush1.bf16.msra.mxu0 0
  %73 = vmatprep.subr.bf16.mxu0 0
  %74 = vmatpush1.bf16.msra.mxu0 0
  %75 = vmatprep.subr.bf16.mxu0 0
  %76 = vmatpush1.bf16.msra.mxu0 0
  %77 = vmatprep.mubr.bf16.mxu0 0
  %78 = vmatmul.mubr.bf16.gmra.mrb[0].mxu0 %v39
  %v79 = vpop.f32.mrb[0].mxu0
  %v80 = vadd.f32 %v35, %v79
  %v81 = vpop.f32.mrb[0].mxu0
  %v82 = vpop.f32.mrb[0].mxu0
  %v83 = vpop.f32.mrb[0].mxu0
  %84 = vdwg.mxu0
  %v85 = vmax.f32 %v80, 0.0
  %v86 = vpack.c.bf16 %v85, %v85
  %v87 = vld [vmem:[%s3] sm:$0xf]
  %v88 = vld [vmem:[%s3 + $0x4] sm:$0xf]
  %v89 = vld [vmem:[%s3 + $0x8] sm:$0xf]
  %v90 = vld [vmem:[%s3 + $0xc] sm:$0xf]
  %v91 = vld [vmem:[%s3 + $0x10] sm:$0xf]
  %v92 = vld [vmem:[%s3 + $0x14] sm:$0xf]
  %v93 = vld [vmem:[%s3 + $0x18] sm:$0xf]
  %v94 = vld [vmem:[%s3 + $0x1c] sm:$0xf]
  %v95 = vld [vmem:[%s3 + $0x20] sm:$0xf]
  %v96 = vld [vmem:[%s3 + $0x24] sm:$0xf]
  %v97 = vld [vmem:[%s3 + $0x28] sm:$0xf]
  %v98 = vld [vmem:[%s3 + $0x2c] sm:$0xf]
  %v99 = vld [vmem:[%s3 + $0x30] sm:$0xf]
  %v100 = vld [vmem:[%s3 + $0x34] sm:$0xf]
  %v101 = vld [vmem:[%s3 + $0x38] sm:$0xf]
  %v102 = vld [vmem:[%s3 + $0x3c] sm:$0xf]
  %v103 = vld [vmem:[%s4] sm:$0x1]
  %v105 = vlaneseq
  %v106 = vshrl.u32 %v105, 7
  %v107 = vsub.s32 0, %v106
  %v108 = vrot.slane %v103, %v107
  %v126 = vunpack.c.l.b16 %v87
  %v127 = vunpack.c.l.b16 %v88
  %v128 = vunpack.c.l.b16 %v89
  %v129 = vunpack.c.l.b16 %v90
  %v130 = vunpack.c.l.b16 %v91
  %v131 = vunpack.c.l.b16 %v92
  %v132 = vunpack.c.l.b16 %v93
  %v133 = vunpack.c.l.b16 %v94
  %v134 = vunpack.c.l.b16 %v95
  %v135 = vunpack.c.l.b16 %v96
  %v136 = vunpack.c.l.b16 %v97
  %v137 = vunpack.c.l.b16 %v98
  %v138 = vunpack.c.l.b16 %v99
  %v139 = vunpack.c.l.b16 %v100
  %v140 = vunpack.c.l.b16 %v101
  %v141 = vunpack.c.l.b16 %v102
  %v142 = vpack.c.b16 %v127, %v126
  %v143 = vpack.c.b16 %v129, %v128
  %v144 = vpack.c.b16 %v131, %v130
  %v145 = vpack.c.b16 %v133, %v132
  %v146 = vpack.c.b16 %v135, %v134
  %v147 = vpack.c.b16 %v137, %v136
  %v148 = vpack.c.b16 %v139, %v138
  %v149 = vpack.c.b16 %v141, %v140
  %158 = vmatprep.subr.bf16.mxu0 0
  %159 = vmatpush1.bf16.msra.mxu0 %v142
  %160 = vmatprep.subr.bf16.mxu0 0
  %161 = vmatpush1.bf16.msra.mxu0 %v143
  %162 = vmatprep.subr.bf16.mxu0 0
  %163 = vmatpush1.bf16.msra.mxu0 %v144
  %164 = vmatprep.subr.bf16.mxu0 0
  %165 = vmatpush1.bf16.msra.mxu0 %v145
  %166 = vmatprep.subr.bf16.mxu0 0
  %167 = vmatpush1.bf16.msra.mxu0 %v146
  %168 = vmatprep.subr.bf16.mxu0 0
  %169 = vmatpush1.bf16.msra.mxu0 %v147
  %170 = vmatprep.subr.bf16.mxu0 0
  %171 = vmatpush1.bf16.msra.mxu0 %v148
  %172 = vmatprep.subr.bf16.mxu0 0
  %173 = vmatpush1.bf16.msra.mxu0 %v149
  %174 = vmatprep.subr.bf16.mxu0 0
  %175 = vmatpush1.bf16.msra.mxu0 0
  %176 = vmatprep.subr.bf16.mxu0 0
  %177 = vmatpush1.bf16.msra.mxu0 0
  %178 = vmatprep.subr.bf16.mxu0 0
  %179 = vmatpush1.bf16.msra.mxu0 0
  %180 = vmatprep.subr.bf16.mxu0 0
  %181 = vmatpush1.bf16.msra.mxu0 0
  %182 = vmatprep.subr.bf16.mxu0 0
  %183 = vmatpush1.bf16.msra.mxu0 0
  %184 = vmatprep.subr.bf16.mxu0 0
  %185 = vmatpush1.bf16.msra.mxu0 0
  %186 = vmatprep.subr.bf16.mxu0 0
  %187 = vmatpush1.bf16.msra.mxu0 0
  %188 = vmatprep.subr.bf16.mxu0 0
  %189 = vmatpush1.bf16.msra.mxu0 0
  %190 = vmatprep.mubr.bf16.mxu0 0
  %191 = vmatmul.mubr.bf16.gmra.mrb[0].mxu0 %v86
  %v192 = vpop.f32.mrb[0].mxu0
  %v193 = vadd.f32 %v108, %v192
  %v194 = vpop.f32.mrb[0].mxu0
  %v195 = vpop.f32.mrb[0].mxu0
  %v196 = vpop.f32.mrb[0].mxu0
  %197 = vdwg.mxu0
  %v198 = vmax.f32 %v193, 0.0
  %v199 = vpack.c.bf16 %v198, %v198
  %v200 = vld [vmem:[%s5] sm:$0xf]
  %v201 = vld [vmem:[%s5 + $0x4] sm:$0xf]
  %v202 = vld [vmem:[%s5 + $0x8] sm:$0xf]
  %v203 = vld [vmem:[%s5 + $0xc] sm:$0xf]
  %v204 = vld [vmem:[%s5 + $0x10] sm:$0xf]
  %v205 = vld [vmem:[%s5 + $0x14] sm:$0xf]
  %v206 = vld [vmem:[%s5 + $0x18] sm:$0xf]
  %v207 = vld [vmem:[%s5 + $0x1c] sm:$0xf]
  %v208 = vld [vmem:[%s5 + $0x20] sm:$0xf]
  %v209 = vld [vmem:[%s5 + $0x24] sm:$0xf]
  %v210 = vld [vmem:[%s5 + $0x28] sm:$0xf]
  %v211 = vld [vmem:[%s5 + $0x2c] sm:$0xf]
  %v212 = vld [vmem:[%s5 + $0x30] sm:$0xf]
  %v213 = vld [vmem:[%s5 + $0x34] sm:$0xf]
  %v214 = vld [vmem:[%s5 + $0x38] sm:$0xf]
  %v215 = vld [vmem:[%s5 + $0x3c] sm:$0xf]
  %v216 = vld [vmem:[%s6] sm:$0x1]
  %v218 = vlaneseq
  %v219 = vshrl.u32 %v218, 7
  %v220 = vsub.s32 0, %v219
  %v221 = vrot.slane %v216, %v220
  %v239 = vunpack.c.l.b16 %v200
  %v240 = vunpack.c.l.b16 %v201
  %v241 = vunpack.c.l.b16 %v202
  %v242 = vunpack.c.l.b16 %v203
  %v243 = vunpack.c.l.b16 %v204
  %v244 = vunpack.c.l.b16 %v205
  %v245 = vunpack.c.l.b16 %v206
  %v246 = vunpack.c.l.b16 %v207
  %v247 = vunpack.c.l.b16 %v208
  %v248 = vunpack.c.l.b16 %v209
  %v249 = vunpack.c.l.b16 %v210
  %v250 = vunpack.c.l.b16 %v211
  %v251 = vunpack.c.l.b16 %v212
  %v252 = vunpack.c.l.b16 %v213
  %v253 = vunpack.c.l.b16 %v214
  %v254 = vunpack.c.l.b16 %v215
  %v255 = vpack.c.b16 %v240, %v239
  %v256 = vpack.c.b16 %v242, %v241
  %v257 = vpack.c.b16 %v244, %v243
  %v258 = vpack.c.b16 %v246, %v245
  %v259 = vpack.c.b16 %v248, %v247
  %v260 = vpack.c.b16 %v250, %v249
  %v261 = vpack.c.b16 %v252, %v251
  %v262 = vpack.c.b16 %v254, %v253
  %271 = vmatprep.subr.bf16.mxu0 0
  %272 = vmatpush1.bf16.msra.mxu0 %v255
  %273 = vmatprep.subr.bf16.mxu0 0
  %274 = vmatpush1.bf16.msra.mxu0 %v256
  %275 = vmatprep.subr.bf16.mxu0 0
  %276 = vmatpush1.bf16.msra.mxu0 %v257
  %277 = vmatprep.subr.bf16.mxu0 0
  %278 = vmatpush1.bf16.msra.mxu0 %v258
  %279 = vmatprep.subr.bf16.mxu0 0
  %280 = vmatpush1.bf16.msra.mxu0 %v259
  %281 = vmatprep.subr.bf16.mxu0 0
  %282 = vmatpush1.bf16.msra.mxu0 %v260
  %283 = vmatprep.subr.bf16.mxu0 0
  %284 = vmatpush1.bf16.msra.mxu0 %v261
  %285 = vmatprep.subr.bf16.mxu0 0
  %286 = vmatpush1.bf16.msra.mxu0 %v262
  %287 = vmatprep.subr.bf16.mxu0 0
  %288 = vmatpush1.bf16.msra.mxu0 0
  %289 = vmatprep.subr.bf16.mxu0 0
  %290 = vmatpush1.bf16.msra.mxu0 0
  %291 = vmatprep.subr.bf16.mxu0 0
  %292 = vmatpush1.bf16.msra.mxu0 0
  %293 = vmatprep.subr.bf16.mxu0 0
  %294 = vmatpush1.bf16.msra.mxu0 0
  %295 = vmatprep.subr.bf16.mxu0 0
  %296 = vmatpush1.bf16.msra.mxu0 0
  %297 = vmatprep.subr.bf16.mxu0 0
  %298 = vmatpush1.bf16.msra.mxu0 0
  %299 = vmatprep.subr.bf16.mxu0 0
  %300 = vmatpush1.bf16.msra.mxu0 0
  %301 = vmatprep.subr.bf16.mxu0 0
  %302 = vmatpush1.bf16.msra.mxu0 0
  %303 = vmatprep.mubr.bf16.mxu0 0
  %304 = vmatmul.mubr.bf16.gmra.mrb[0].mxu0 %v199
  %v305 = vpop.f32.mrb[0].mxu0
  %v306 = vadd.f32 %v221, %v305
  %v307 = vpop.f32.mrb[0].mxu0
  %v308 = vpop.f32.mrb[0].mxu0
  %v309 = vpop.f32.mrb[0].mxu0
  %310 = vdwg.mxu0
  %vm311 = vcmask 23552
  %312 = vst.msk [vmem:[%s7] sm:$0xff] %vm311, %v306
  // Predicated region
  $region30: #{policy_forward.1} parent=0 // pred_check
    _
  $region31: #{policy_forward.1} parent=0 // pred_check_branch
    %314 = sbr.rel (0) target = $region33
  $region32: #{policy_forward.1} parent=0 // pred_region
    _
  $region33: #{policy_forward.1} parent=0 // pred_fallthru
    _
  // Predicated region
  $region34: #{policy_forward.1} parent=0 // pred_check
    _
  $region35: #{policy_forward.1} parent=0 // pred_check_branch
    %316 = sbr.rel (0) target = $region37
  $region36: #{policy_forward.1} parent=0 // pred_region
    _
  $region37: #{policy_forward.1} parent=0 // pred_fallthru
    _

</llo_original>
